<compile_context>
chip_gen: v5e
topology: v5e:2x2
jax: 0.10.0
libtpu: 0.0.40
codegen_flags: <defaults>
</compile_context>

<pallas_src>
import functools

import jax
import jax.numpy as jnp
from jax.experimental import pallas as pl
from jax.experimental.pallas import tpu as pltpu


def _round_up(x, m):
    return (x + m - 1) // m * m


def _make_neumf_kernel(num_layers, dim):
    """Kernel body for NeuMF scoring on packed activations.

    refs = [x, W1_packed, b1, (W_l, b_l) * (num_layers-1),
            wf_mf, wf_mlp, bf_smem, out]
    x:        (tb, 4*dim)  rows are [u_mf | i_mf | u_mlp | i_mlp]
    out:      (1, 1, tb)   lane-dense scores for this batch tile
    """

    def kernel(*refs):
        x_ref = refs[0]
        out_ref = refs[-1]
        bf_ref = refs[-2]        # (1,1) f32 in SMEM
        wf_mlp_ref = refs[-3]    # (1, h_last)
        wf_mf_ref = refs[-4]     # (1, dim)
        w = refs[1:-4]           # [W1_packed, b1, W2, b2, ...]

        x = x_ref[...]                                        # (tb, 4*dim) f32

        # ---- MLP branch: one lane-dense K=4*dim matmul (W1 zero-padded) ----
        h = jnp.dot(x, w[0][...], preferred_element_type=jnp.float32)
        h = jnp.maximum(h + w[1][...], 0.0)
        idx = 2
        for _ in range(1, num_layers):
            h = jnp.dot(h, w[idx][...], preferred_element_type=jnp.float32)
            h = jnp.maximum(h + w[idx + 1][...], 0.0)
            idx += 2

        # ---- MF branch (pure VPU) ----
        mf = x[:, 0:dim] * x[:, dim:2 * dim]                  # (tb, dim)

        # ---- Final Linear(.,1): VPU multiply + lane reduce (no N=1 matmul) --
        score = (jnp.sum(mf * wf_mf_ref[...], axis=-1)
                 + jnp.sum(h * wf_mlp_ref[...], axis=-1)
                 + bf_ref[0, 0])                              # (tb,)

        # Lane-dense store: batch tile lives on the lane axis of the output.
        out_ref[0, 0, :] = score

    return kernel


def neumf_score_packed(x_packed, params, *, tb=512):
    """Scores packed rows [u_mf | i_mf | u_mlp | i_mlp]. Returns (N,) scores."""
    N, four_dim = x_packed.shape
    dim = four_dim // 4
    mlp_layers, Wf, bf = params
    num_layers = len(mlp_layers)

    # Zero-pad the first MLP weight so the packed input feeds it directly:
    # x_packed @ W1_packed == concat([u_mlp, i_mlp]) @ W1.
    W1, b1 = mlp_layers[0]
    h1 = W1.shape[1]
    W1_packed = jnp.concatenate(
        [jnp.zeros((2 * dim, h1), W1.dtype), W1], axis=0)     # (4*dim, h1)

    h_last = Wf.shape[0] - dim
    wf_mf = Wf[:dim].reshape(1, dim)
    wf_mlp = Wf[dim:].reshape(1, h_last)
    bf = bf.reshape(1, 1).astype(jnp.float32)

    weights = [W1_packed, b1]
    for (W, b) in mlp_layers[1:]:
        weights += [W, b]
    weights += [wf_mf, wf_mlp]

    # Batch tiling: batch rows on sublanes / output lanes. Pad batch.
    tb_eff = min(tb, _round_up(N, 8))
    N_pad = _round_up(N, tb_eff)
    if N_pad != N:
        x_packed = jnp.pad(x_packed, ((0, N_pad - N), (0, 0)))
    n_tiles = N_pad // tb_eff

    def _const_spec(arr):
        nd = arr.ndim
        return pl.BlockSpec(arr.shape, lambda i: (0,) * nd)

    in_specs = [pl.BlockSpec((tb_eff, four_dim), lambda i: (i, 0))]
    in_specs += [_const_spec(w) for w in weights]
    in_specs += [pl.BlockSpec(memory_space=pltpu.MemorySpace.SMEM)]   # bf

    out_spec = pl.BlockSpec((1, 1, tb_eff), lambda i: (i, 0, 0))
    out_shape = jax.ShapeDtypeStruct((n_tiles, 1, tb_eff), jnp.float32)

    # Advisory cost estimate for the XLA scheduler.
    layer_dims = [(4 * dim, h1)] + [(W.shape[0], W.shape[1])
                                    for (W, b) in mlp_layers[1:]]
    flops = 2 * N_pad * (sum(a * b for a, b in layer_dims) + Wf.shape[0])
    bytes_accessed = (x_packed.size + sum(int(w.size) for w in weights)
                      + 1 + N_pad) * 4
    cost = pl.CostEstimate(flops=int(flops), transcendentals=0,
                           bytes_accessed=int(bytes_accessed))

    out = pl.pallas_call(
        _make_neumf_kernel(num_layers, dim),
        out_shape=out_shape,
        grid_spec=pltpu.PrefetchScalarGridSpec(
            num_scalar_prefetch=0,
            grid=(n_tiles,),
            in_specs=in_specs,
            out_specs=out_spec,
        ),
        compiler_params=pltpu.CompilerParams(
            dimension_semantics=("parallel",)),
        cost_estimate=cost,
    )(x_packed, *weights, bf)

    return out.reshape(N_pad)[:N]


def neumf_forward(batch_user, batch_pos_item, batch_neg_item, embeddings,
                  params, *, tb=512):
    """Full NeuMF forward: returns (pos_score, neg_score), each (B, 1)."""
    user_emb_MF, item_emb_MF, user_emb_MLP, item_emb_MLP = embeddings
    B = batch_user.shape[0]

    # Gather user rows ONCE and reuse for pos and neg (fused scoring call).
    u_mf = user_emb_MF[batch_user]
    u_mlp = user_emb_MLP[batch_user]
    items = jnp.concatenate([batch_pos_item, batch_neg_item], axis=0)
    i_mf = item_emb_MF[items]
    i_mlp = item_emb_MLP[items]
    u_mf2 = jnp.concatenate([u_mf, u_mf], axis=0)
    u_mlp2 = jnp.concatenate([u_mlp, u_mlp], axis=0)

    # Lane-dense packed activations: (2B, 4*dim).
    x_packed = jnp.concatenate([u_mf2, i_mf, u_mlp2, i_mlp],
                               axis=-1).astype(jnp.float32)

    scores = neumf_score_packed(x_packed, params, tb=tb)       # (2B,)
    pos_score = scores[:B].reshape(B, 1)
    neg_score = scores[B:].reshape(B, 1)
    return pos_score, neg_score


def init_neumf_params(key, user_count, item_count, dim, num_layers):
    """Deterministic synthetic initialization matching the module's shapes."""
    keys = jax.random.split(key, 6 + 2 * num_layers)
    k = iter(keys)

    # Embeddings: normal(0, 0.01)
    user_emb_MF = 0.01 * jax.random.normal(next(k), (user_count, dim), jnp.float32)
    item_emb_MF = 0.01 * jax.random.normal(next(k), (item_count, dim), jnp.float32)
    user_emb_MLP = 0.01 * jax.random.normal(next(k), (user_count, dim), jnp.float32)
    item_emb_MLP = 0.01 * jax.random.normal(next(k), (item_count, dim), jnp.float32)

    # MLP layers: layers_shape = [2*dim, dim, dim/2, ...]; xavier-uniform, bias 0.
    layers_shape = [dim * 2]
    mlp_layers = []
    for _ in range(num_layers):
        layers_shape.append(layers_shape[-1] // 2)
        fan_in, fan_out = layers_shape[-2], layers_shape[-1]
        limit = (6.0 / (fan_in + fan_out)) ** 0.5
        W = jax.random.uniform(next(k), (fan_in, fan_out), jnp.float32,
                               minval=-limit, maxval=limit)
        b = jnp.zeros((1, fan_out), jnp.float32)
        mlp_layers.append((W, b))

    # Final layer: Linear(layers_shape[-1] + dim, 1), kaiming-uniform(a=1), bias 0.
    fin_in = layers_shape[-1] + dim
    limit = (3.0 / fin_in) ** 0.5
    Wf = jax.random.uniform(next(k), (fin_in, 1), jnp.float32,
                            minval=-limit, maxval=limit)
    bf = jnp.zeros((1, 1), jnp.float32)

    embeddings = (user_emb_MF, item_emb_MF, user_emb_MLP, item_emb_MLP)
    params = (tuple(mlp_layers), Wf, bf)
    return embeddings, params


def neumf_reference(batch_user, batch_pos_item, batch_neg_item, embeddings, params):
    """Pure-JAX reference mirroring the PyTorch forward, for correctness check."""
    user_emb_MF, item_emb_MF, user_emb_MLP, item_emb_MLP = embeddings
    mlp_layers, Wf, bf = params

    def score(users, items):
        mf = user_emb_MF[users] * item_emb_MF[items]
        x = jnp.concatenate([user_emb_MLP[users], item_emb_MLP[items]], axis=-1)
        for (W, b) in mlp_layers:
            x = jax.nn.relu(x @ W + b)
        pred = jnp.concatenate([mf, x], axis=-1)
        return pred @ Wf + bf

    return score(batch_user, batch_pos_item), score(batch_user, batch_neg_item)


if __name__ == "__main__":
    user_count = 100
    item_count = 200
    dim = 32
    num_layers = 2       # MLP layer shape: [64, 32, 16]
    batch = 16

    key = jax.random.PRNGKey(0)
    k_param, k_u, k_p, k_n = jax.random.split(key, 4)

    embeddings, params = init_neumf_params(k_param, user_count, item_count,
                                           dim, num_layers)

    batch_user = jax.random.randint(k_u, (batch,), 0, user_count, jnp.int32)
    batch_pos_item = jax.random.randint(k_p, (batch,), 0, item_count, jnp.int32)
    batch_neg_item = jax.random.randint(k_n, (batch,), 0, item_count, jnp.int32)

    pos_score, neg_score = neumf_forward(batch_user, batch_pos_item,
                                         batch_neg_item, embeddings, params)
    pos_score = jax.block_until_ready(pos_score)
    neg_score = jax.block_until_ready(neg_score)

    ref_pos, ref_neg = neumf_reference(batch_user, batch_pos_item,
                                       batch_neg_item, embeddings, params)
    assert pos_score.shape == (batch, 1) and neg_score.shape == (batch, 1)
    assert jnp.allclose(pos_score, ref_pos, atol=1e-5, rtol=1e-5)
    assert jnp.allclose(neg_score, ref_neg, atol=1e-5, rtol=1e-5)

    # Also exercise the multi-tile (grid > 1) + batch-padding path.
    batch2 = 300
    ku2, kp2, kn2 = jax.random.split(jax.random.PRNGKey(1), 3)
    bu2 = jax.random.randint(ku2, (batch2,), 0, user_count, jnp.int32)
    bp2 = jax.random.randint(kp2, (batch2,), 0, item_count, jnp.int32)
    bn2 = jax.random.randint(kn2, (batch2,), 0, item_count, jnp.int32)
    p2, n2 = neumf_forward(bu2, bp2, bn2, embeddings, params, tb=128)
    p2 = jax.block_until_ready(p2)
    n2 = jax.block_until_ready(n2)
    rp2, rn2 = neumf_reference(bu2, bp2, bn2, embeddings, params)
    assert jnp.allclose(p2, rp2, atol=1e-5, rtol=1e-5)
    assert jnp.allclose(n2, rn2, atol=1e-5, rtol=1e-5)

    print("KERNEL_OK")
</pallas_src>

<mosaic_0001>
module attributes {stable_mosaic.version = 11 : i64} {
  func.func @kernel(%arg0: i32, %arg1: memref<32x128xf32, #tpu.memory_space<vmem>>, %arg2: memref<128x32xf32, #tpu.memory_space<vmem>>, %arg3: memref<1x32xf32, #tpu.memory_space<vmem>>, %arg4: memref<32x16xf32, #tpu.memory_space<vmem>>, %arg5: memref<1x16xf32, #tpu.memory_space<vmem>>, %arg6: memref<1x32xf32, #tpu.memory_space<vmem>>, %arg7: memref<1x16xf32, #tpu.memory_space<vmem>>, %arg8: memref<1x1xf32, #tpu.memory_space<smem>>, %arg9: memref<1x1x32xf32, #tpu.memory_space<vmem>>) attributes {dimension_semantics = [#tpu.dimension_semantics<parallel>], iteration_bounds = array<i64: 1>, scalar_prefetch = 0 : i64, scratch_operands = 0 : i64, tpu.core_type = #tpu.core_type<tc>, window_params = [{transform_indices = @transform_0, window_bounds = array<i64: 32, 128>}, {pipeline_mode = #tpu.pipeline_mode<synchronous>, transform_indices = @transform_1, window_bounds = array<i64: 128, 32>}, {pipeline_mode = #tpu.pipeline_mode<synchronous>, transform_indices = @transform_2, window_bounds = array<i64: 1, 32>}, {pipeline_mode = #tpu.pipeline_mode<synchronous>, transform_indices = @transform_3, window_bounds = array<i64: 32, 16>}, {pipeline_mode = #tpu.pipeline_mode<synchronous>, transform_indices = @transform_4, window_bounds = array<i64: 1, 16>}, {pipeline_mode = #tpu.pipeline_mode<synchronous>, transform_indices = @transform_5, window_bounds = array<i64: 1, 32>}, {pipeline_mode = #tpu.pipeline_mode<synchronous>, transform_indices = @transform_6, window_bounds = array<i64: 1, 16>}, {transform_indices = @transform_7, window_bounds = array<i64: 1, 1>}, {transform_indices = @transform_8, window_bounds = array<i64: 1, 1, 32>}]} {
    %c0 = arith.constant 0 : index
    %c0_0 = arith.constant 0 : index
    %0 = vector.load %arg1[%c0, %c0_0] : memref<32x128xf32, #tpu.memory_space<vmem>>, vector<32x128xf32>
    %c0_1 = arith.constant 0 : index
    %c0_2 = arith.constant 0 : index
    %1 = vector.load %arg2[%c0_1, %c0_2] : memref<128x32xf32, #tpu.memory_space<vmem>>, vector<128x32xf32>
    %cst = arith.constant dense<0.000000e+00> : vector<32x32xf32>
    %2 = tpu.matmul %0, %1, %cst {dimension_numbers = #tpu.dot_dimension_numbers<[1], [0], [0], [1], [0, 0, 1, 1], [], []>} : vector<32x128xf32>, vector<128x32xf32>, vector<32x32xf32> -> vector<32x32xf32>
    %c0_3 = arith.constant 0 : index
    %c0_4 = arith.constant 0 : index
    %3 = vector.load %arg3[%c0_3, %c0_4] : memref<1x32xf32, #tpu.memory_space<vmem>>, vector<1x32xf32>
    %4 = vector.broadcast %3 : vector<1x32xf32> to vector<32x32xf32>
    %5 = arith.addf %2, %4 : vector<32x32xf32>
    %cst_5 = arith.constant 0.000000e+00 : f32
    %6 = vector.broadcast %cst_5 : f32 to vector<32x32xf32>
    %7 = arith.maximumf %5, %6 : vector<32x32xf32>
    %c0_6 = arith.constant 0 : index
    %c0_7 = arith.constant 0 : index
    %8 = vector.load %arg4[%c0_6, %c0_7] : memref<32x16xf32, #tpu.memory_space<vmem>>, vector<32x16xf32>
    %cst_8 = arith.constant dense<0.000000e+00> : vector<32x16xf32>
    %9 = tpu.matmul %7, %8, %cst_8 {dimension_numbers = #tpu.dot_dimension_numbers<[1], [0], [0], [1], [0, 0, 1, 1], [], []>} : vector<32x32xf32>, vector<32x16xf32>, vector<32x16xf32> -> vector<32x16xf32>
    %c0_9 = arith.constant 0 : index
    %c0_10 = arith.constant 0 : index
    %10 = vector.load %arg5[%c0_9, %c0_10] : memref<1x16xf32, #tpu.memory_space<vmem>>, vector<1x16xf32>
    %11 = vector.broadcast %10 : vector<1x16xf32> to vector<32x16xf32>
    %12 = arith.addf %9, %11 : vector<32x16xf32>
    %cst_11 = arith.constant 0.000000e+00 : f32
    %13 = vector.broadcast %cst_11 : f32 to vector<32x16xf32>
    %14 = arith.maximumf %12, %13 : vector<32x16xf32>
    %15 = vector.extract_strided_slice %0 {offsets = [0, 0], sizes = [32, 32], strides = [1, 1]} : vector<32x128xf32> to vector<32x32xf32>
    %16 = vector.extract_strided_slice %0 {offsets = [0, 32], sizes = [32, 32], strides = [1, 1]} : vector<32x128xf32> to vector<32x32xf32>
    %17 = arith.mulf %15, %16 : vector<32x32xf32>
    %c0_12 = arith.constant 0 : index
    %c0_13 = arith.constant 0 : index
    %18 = vector.load %arg6[%c0_12, %c0_13] : memref<1x32xf32, #tpu.memory_space<vmem>>, vector<1x32xf32>
    %19 = vector.broadcast %18 : vector<1x32xf32> to vector<32x32xf32>
    %20 = arith.mulf %17, %19 : vector<32x32xf32>
    %cst_14 = arith.constant dense<0.000000e+00> : vector<32xf32>
    %21 = vector.multi_reduction <add>, %20, %cst_14 [1] : vector<32x32xf32> to vector<32xf32>
    %c0_15 = arith.constant 0 : index
    %c0_16 = arith.constant 0 : index
    %22 = vector.load %arg7[%c0_15, %c0_16] : memref<1x16xf32, #tpu.memory_space<vmem>>, vector<1x16xf32>
    %23 = vector.broadcast %22 : vector<1x16xf32> to vector<32x16xf32>
    %24 = arith.mulf %14, %23 : vector<32x16xf32>
    %cst_17 = arith.constant dense<0.000000e+00> : vector<32xf32>
    %25 = vector.multi_reduction <add>, %24, %cst_17 [1] : vector<32x16xf32> to vector<32xf32>
    %26 = arith.addf %21, %25 : vector<32xf32>
    %c0_18 = arith.constant 0 : index
    %c0_19 = arith.constant 0 : index
    %27 = memref.load %arg8[%c0_18, %c0_19] : memref<1x1xf32, #tpu.memory_space<smem>>
    %28 = vector.broadcast %27 : f32 to vector<32xf32>
    %29 = arith.addf %26, %28 : vector<32xf32>
    %c0_20 = arith.constant 0 : index
    %c0_21 = arith.constant 0 : index
    %c0_22 = arith.constant 0 : index
    %30 = vector.load %arg9[%c0_20, %c0_21, %c0_22] : memref<1x1x32xf32, #tpu.memory_space<vmem>>, vector<1x1x32xf32>
    %31 = vector.shape_cast %30 : vector<1x1x32xf32> to vector<32xf32>
    %32 = vector.shape_cast %29 : vector<32xf32> to vector<1x1x32xf32>
    tpu.vector_store %arg9[%c0_20, %c0_21, %c0_22], %32 {strides = array<i32>} : memref<1x1x32xf32, #tpu.memory_space<vmem>>, vector<1x1x32xf32>,
    return
  }
  func.func @transform_0(%arg0: i32) -> (i32, i32) {
    %c0_i32 = arith.constant 0 : i32
    %c0_i32_0 = arith.constant 0 : i32
    return %arg0, %c0_i32 : i32, i32
  }
  func.func @transform_1(%arg0: i32) -> (i32, i32) {
    %c0_i32 = arith.constant 0 : i32
    %c0_i32_0 = arith.constant 0 : i32
    %c0_i32_1 = arith.constant 0 : i32
    return %c0_i32, %c0_i32_0 : i32, i32
  }
  func.func @transform_2(%arg0: i32) -> (i32, i32) {
    %c0_i32 = arith.constant 0 : i32
    %c0_i32_0 = arith.constant 0 : i32
    %c0_i32_1 = arith.constant 0 : i32
    return %c0_i32, %c0_i32_0 : i32, i32
  }
  func.func @transform_3(%arg0: i32) -> (i32, i32) {
    %c0_i32 = arith.constant 0 : i32
    %c0_i32_0 = arith.constant 0 : i32
    %c0_i32_1 = arith.constant 0 : i32
    return %c0_i32, %c0_i32_0 : i32, i32
  }
  func.func @transform_4(%arg0: i32) -> (i32, i32) {
    %c0_i32 = arith.constant 0 : i32
    %c0_i32_0 = arith.constant 0 : i32
    %c0_i32_1 = arith.constant 0 : i32
    return %c0_i32, %c0_i32_0 : i32, i32
  }
  func.func @transform_5(%arg0: i32) -> (i32, i32) {
    %c0_i32 = arith.constant 0 : i32
    %c0_i32_0 = arith.constant 0 : i32
    %c0_i32_1 = arith.constant 0 : i32
    return %c0_i32, %c0_i32_0 : i32, i32
  }
  func.func @transform_6(%arg0: i32) -> (i32, i32) {
    %c0_i32 = arith.constant 0 : i32
    %c0_i32_0 = arith.constant 0 : i32
    %c0_i32_1 = arith.constant 0 : i32
    return %c0_i32, %c0_i32_0 : i32, i32
  }
  func.func @transform_7(%arg0: i32) -> (i32, i32) {
    %c0_i32 = arith.constant 0 : i32
    %c0_i32_0 = arith.constant 0 : i32
    %c0_i32_1 = arith.constant 0 : i32
    return %c0_i32, %c0_i32_0 : i32, i32
  }
  func.func @transform_8(%arg0: i32) -> (i32, i32, i32) {
    %c0_i32 = arith.constant 0 : i32
    %c0_i32_0 = arith.constant 0 : i32
    %c0_i32_1 = arith.constant 0 : i32
    return %arg0, %c0_i32, %c0_i32_0 : i32, i32, i32
  }
}

</mosaic_0001>

<llo_original>
// kernel: tpu_custom_call.1
$region0: #{tpu_custom_call.1}
  #allocation0 [shape = 'u32[]', space=smem, size = 0x4, offset = 0x4, fixed_abs, tag = 'smem constant byte address 0x4 - core index']
  #allocation1 [shape = 'u32[72,128]{1,0:T(1,128)}', space=vmem, size = 0x9000, scoped, tag = 'internal scratch']
  #allocation2 [shape = 'f32[1,1]{1,0:T(1,128)S(6)}', space=smem, size = 0x200, scoped, tag = 'scoped memory for tpu_custom_call.1']
  %s0 = inlined_call_operand.vmem [shape: f32[32,128], index: 0, kind: input, shape index: {}]
  %s1 = inlined_call_operand.vmem [shape: f32[128,32], index: 1, kind: input, shape index: {}]
  %s2 = inlined_call_operand.vmem [shape: f32[1,32], index: 2, kind: input, shape index: {}]
  %s3 = inlined_call_operand.vmem [shape: f32[32,16], index: 3, kind: input, shape index: {}]
  %s4 = inlined_call_operand.vmem [shape: f32[1,16], index: 4, kind: input, shape index: {}]
  %s5 = inlined_call_operand.vmem [shape: f32[1,32], index: 5, kind: input, shape index: {}]
  %s6 = inlined_call_operand.vmem [shape: f32[1,16], index: 6, kind: input, shape index: {}]
  %s7 = inlined_call_operand.<no memory space> [shape: f32[1,1], index: 7, kind: input, shape index: {}]
  %s8 = inlined_call_operand.hbm [shape: f32[1,1,32], index: 8, kind: output, shape index: {}]
  %s9 = sld [smem:[#allocation0]]
  $region42: #{tpu_custom_call.1} parent=0
    _
  %s11 = ssub.s32 1, %s9
  %s12 = scalar_select 0, %s11, %s9
  %13 = sst [smem:[#allocation2]] %s7
  $region1: #{tpu_custom_call.1} parent=0
    #allocation3 [shape = 'u8[512]{0}', space=vmem, size = 0x400, scoped, tag = 'output window, operand 0, single buffered']
    #allocation4 [shape = 's32[1]{0}', space=sflag, size = 0x4, scoped, tag = 'scoped memory for tpu_custom_call.1']
    %14 = vsyncpa [#allocation4], 0
    // Predicated region
    $region2: #{tpu_custom_call.1} parent=1 // pred_check
      _
    $region3: #{tpu_custom_call.1} parent=1 // pred_check_branch
      %16 = sbr.rel (0) target = $region5
    $region4: #{tpu_custom_call.1} parent=1 // pred_region
      _
    $region5: #{tpu_custom_call.1} parent=1 // pred_fallthru
      _
    // Predicated region
    $region6: #{tpu_custom_call.1} parent=1 // pred_check
      _
    $region7: #{tpu_custom_call.1} parent=1 // pred_check_branch
      %18 = sbr.rel (0) target = $region9
    $region8: #{tpu_custom_call.1} parent=1 // pred_region
      _
    $region9: #{tpu_custom_call.1} parent=1 // pred_fallthru
      _
    // Predicated region
    $region10: #{tpu_custom_call.1} parent=1 // pred_check
      _
    $region11: #{tpu_custom_call.1} parent=1 // pred_check_branch
      %20 = sbr.rel (0) target = $region13
    $region12: #{tpu_custom_call.1} parent=1 // pred_region
      _
    $region13: #{tpu_custom_call.1} parent=1 // pred_fallthru
      _
    // Predicated region
    $region14: #{tpu_custom_call.1} parent=1 // pred_check
      _
    $region15: #{tpu_custom_call.1} parent=1 // pred_check_branch
      %22 = sbr.rel (0) target = $region17
    $region16: #{tpu_custom_call.1} parent=1 // pred_region
      _
    $region17: #{tpu_custom_call.1} parent=1 // pred_fallthru
      _
    // Predicated region
    $region18: #{tpu_custom_call.1} parent=1 // pred_check
      _
    $region19: #{tpu_custom_call.1} parent=1 // pred_check_branch
      %24 = sbr.rel (0) target = $region21
    $region20: #{tpu_custom_call.1} parent=1 // pred_region
      _
    $region21: #{tpu_custom_call.1} parent=1 // pred_fallthru
      _
    // Predicated region
    $region22: #{tpu_custom_call.1} parent=1 // pred_check
      _
    $region23: #{tpu_custom_call.1} parent=1 // pred_check_branch
      %26 = sbr.rel (0) target = $region25
    $region24: #{tpu_custom_call.1} parent=1 // pred_region
      _
    $region25: #{tpu_custom_call.1} parent=1 // pred_fallthru
      _
    // Predicated region
    $region26: #{tpu_custom_call.1} parent=1 // pred_check
      _
    $region27: #{tpu_custom_call.1} parent=1 // pred_check_branch
      %28 = sbr.rel (0) target = $region29
    $region28: #{tpu_custom_call.1} parent=1 // pred_region
      _
    $region29: #{tpu_custom_call.1} parent=1 // pred_fallthru
      _
    // Predicated region
    $region30: #{tpu_custom_call.1} parent=1 // pred_check
      _
    $region31: #{tpu_custom_call.1} parent=1 // pred_check_branch
      %30 = sbr.rel (0) target = $region33
    $region32: #{tpu_custom_call.1} parent=1 // pred_region
      _
    $region33: #{tpu_custom_call.1} parent=1 // pred_fallthru
      _
    %v31 = vld [vmem:[%s0] sm:$0xff]
    %v32 = vld [vmem:[%s0 + $0x8] sm:$0xff]
    %v33 = vld [vmem:[%s0 + $0x10] sm:$0xff]
    %v34 = vld [vmem:[%s0 + $0x18] sm:$0xff]
    %v35 = vld [vmem:[%s1] sm:$0xff]
    %v36 = vld [vmem:[%s1 + $0x8] sm:$0xff]
    %v37 = vld [vmem:[%s1 + $0x10] sm:$0xff]
    %v38 = vld [vmem:[%s1 + $0x18] sm:$0xff]
    %v39 = vld [vmem:[%s1 + $0x20] sm:$0xff]
    %v40 = vld [vmem:[%s1 + $0x28] sm:$0xff]
    %v41 = vld [vmem:[%s1 + $0x30] sm:$0xff]
    %v42 = vld [vmem:[%s1 + $0x38] sm:$0xff]
    %v43 = vld [vmem:[%s1 + $0x40] sm:$0xff]
    %v44 = vld [vmem:[%s1 + $0x48] sm:$0xff]
    %v45 = vld [vmem:[%s1 + $0x50] sm:$0xff]
    %v46 = vld [vmem:[%s1 + $0x58] sm:$0xff]
    %v47 = vld [vmem:[%s1 + $0x60] sm:$0xff]
    %v48 = vld [vmem:[%s1 + $0x68] sm:$0xff]
    %v49 = vld [vmem:[%s1 + $0x70] sm:$0xff]
    %v50 = vld [vmem:[%s1 + $0x78] sm:$0xff]
    %v51 = vld [vmem:[%s2] sm:$0x1]
    %v53 = vperm.slane %v51, 0
    %55 = vmatpush.msra.mxu0 %v50
    %56 = vmatpush.msra.mxu0 %v49
    %57 = vmatpush.msra.mxu0 %v48
    %58 = vmatpush.msra.mxu0 %v47
    %59 = vmatpush.msra.mxu0 %v46
    %60 = vmatpush.msra.mxu0 %v45
    %61 = vmatpush.msra.mxu0 %v44
    %62 = vmatpush.msra.mxu0 %v43
    %63 = vmatpush.msra.mxu0 %v42
    %64 = vmatpush.msra.mxu0 %v41
    %65 = vmatpush.msra.mxu0 %v40
    %66 = vmatpush.msra.mxu0 %v39
    %67 = vmatpush.msra.mxu0 %v38
    %68 = vmatpush.msra.mxu0 %v37
    %69 = vmatpush.msra.mxu0 %v36
    %70 = vmatpush.msra.mxu0 %v35
    %71 = vmatmul.f32.gmra.mxu0 %v31
    %v72 = vpop.f32.mrf.mxu0
    %v73 = vadd.f32 %v53, %v72
    %74 = vmatmul.f32.gmra.mxu0 %v32
    %v75 = vpop.f32.mrf.mxu0
    %v76 = vadd.f32 %v53, %v75
    %77 = vmatmul.f32.gmra.mxu0 %v33
    %v78 = vpop.f32.mrf.mxu0
    %v79 = vadd.f32 %v53, %v78
    %80 = vmatmul.f32.gmra.mxu0 %v34
    %v81 = vpop.f32.mrf.mxu0
    %v82 = vadd.f32 %v53, %v81
    %83 = vdwg.mxu0
    %v84 = vmax.f32 %v73, 0.0
    %v85 = vmax.f32 %v76, 0.0
    %v86 = vmax.f32 %v79, 0.0
    %v87 = vmax.f32 %v82, 0.0
    %v88 = vld [vmem:[%s3] sm:$0xff]
    %v89 = vld [vmem:[%s3 + $0x8] sm:$0xff]
    %v90 = vld [vmem:[%s3 + $0x10] sm:$0xff]
    %v91 = vld [vmem:[%s3 + $0x18] sm:$0xff]
    %v92 = vld [vmem:[%s4] sm:$0x1]
    %v94 = vperm.slane %v92, 0
    %vm96 = vcmask 261120
    %v98 = vsel %vm96, %v84, 0
    %v101 = vsel %vm96, %v85, 0
    %v104 = vsel %vm96, %v86, 0
    %v107 = vsel %vm96, %v87, 0
    %109 = vmatpush.msra.mxu0 0.0
    %110 = vmatpush.msra.mxu0 0.0
    %111 = vmatpush.msra.mxu0 0.0
    %112 = vmatpush.msra.mxu0 0.0
    %113 = vmatpush.msra.mxu0 0.0
    %114 = vmatpush.msra.mxu0 0.0
    %115 = vmatpush.msra.mxu0 0.0
    %116 = vmatpush.msra.mxu0 0.0
    %117 = vmatpush.msra.mxu0 0.0
    %118 = vmatpush.msra.mxu0 0.0
    %119 = vmatpush.msra.mxu0 0.0
    %120 = vmatpush.msra.mxu0 0.0
    %121 = vmatpush.msra.mxu0 %v91
    %122 = vmatpush.msra.mxu0 %v90
    %123 = vmatpush.msra.mxu0 %v89
    %124 = vmatpush.msra.mxu0 %v88
    %125 = vmatmul.f32.gmra.mxu0 %v98
    %v126 = vpop.f32.mrf.mxu0
    %v127 = vadd.f32 %v94, %v126
    %128 = vmatmul.f32.gmra.mxu0 %v101
    %v129 = vpop.f32.mrf.mxu0
    %v130 = vadd.f32 %v94, %v129
    %131 = vmatmul.f32.gmra.mxu0 %v104
    %v132 = vpop.f32.mrf.mxu0
    %v133 = vadd.f32 %v94, %v132
    %134 = vmatmul.f32.gmra.mxu0 %v107
    %v135 = vpop.f32.mrf.mxu0
    %v136 = vadd.f32 %v94, %v135
    %137 = vdwg.mxu0
    %v138 = vmax.f32 %v127, 0.0
    %v139 = vmax.f32 %v130, 0.0
    %v140 = vmax.f32 %v133, 0.0
    %v141 = vmax.f32 %v136, 0.0
    %146 = vrot.lane.b32.xlu0 %v31, 96
    %v147 = vpop.permute.xlu0 %146
    %148 = vrot.lane.b32.xlu0 %v32, 96
    %v149 = vpop.permute.xlu0 %148
    %150 = vrot.lane.b32.xlu0 %v33, 96
    %v151 = vpop.permute.xlu0 %150
    %152 = vrot.lane.b32.xlu0 %v34, 96
    %v153 = vpop.permute.xlu0 %152
    %v158 = vmul.f32 %v31, %v147
    %v159 = vmul.f32 %v32, %v149
    %v160 = vmul.f32 %v33, %v151
    %v161 = vmul.f32 %v34, %v153
    %v162 = vld [vmem:[%s5] sm:$0x1]
    %v164 = vperm.slane %v162, 0
    %v166 = vmul.f32 %v158, %v164
    %v167 = vmul.f32 %v159, %v164
    %v168 = vmul.f32 %v160, %v164
    %v169 = vmul.f32 %v161, %v164
    %v170 = vsel %vm96, %v166, 0.0
    %171 = vadd.xlane.f32.xlu0 %v170
    %v172 = vpop.xlane.xlu0 %171
    %v173 = vsel %vm96, %v167, 0.0
    %174 = vadd.xlane.f32.xlu0 %v173
    %v175 = vpop.xlane.xlu0 %174
    %v176 = vsel %vm96, %v168, 0.0
    %177 = vadd.xlane.f32.xlu0 %v176
    %v178 = vpop.xlane.xlu0 %177
    %v179 = vsel %vm96, %v169, 0.0
    %180 = vadd.xlane.f32.xlu0 %v179
    %v181 = vpop.xlane.xlu0 %180
    %v182 = vld [vmem:[%s6] sm:$0x1]
    %v184 = vperm.slane %v182, 0
    %v186 = vmul.f32 %v138, %v184
    %v187 = vmul.f32 %v139, %v184
    %v188 = vmul.f32 %v140, %v184
    %v189 = vmul.f32 %v141, %v184
    %vm190 = vcmask 130048
    %v191 = vsel %vm190, %v186, 0.0
    %192 = vadd.xlane.f32.xlu0 %v191
    %v193 = vpop.xlane.xlu0 %192
    %v194 = vsel %vm190, %v187, 0.0
    %195 = vadd.xlane.f32.xlu0 %v194
    %v196 = vpop.xlane.xlu0 %195
    %v197 = vsel %vm190, %v188, 0.0
    %198 = vadd.xlane.f32.xlu0 %v197
    %v199 = vpop.xlane.xlu0 %198
    %v200 = vsel %vm190, %v189, 0.0
    %201 = vadd.xlane.f32.xlu0 %v200
    %v202 = vpop.xlane.xlu0 %201
    %v203 = vadd.f32 %v172, %v193
    %v204 = vadd.f32 %v175, %v196
    %v205 = vadd.f32 %v178, %v199
    %v206 = vadd.f32 %v181, %v202
    %s207 = sld [smem:[#allocation2]]
    %v208 = vstv %s207
    %v209 = vadd.f32 %v203, %v208
    %v210 = vadd.f32 %v204, %v208
    %v211 = vadd.f32 %v205, %v208
    %v212 = vadd.f32 %v206, %v208
    %v217 = vlaneseq
    %v218 = vand.u32 %v217, 127
    %v219 = vperm.slane %v209, %v218
    %v220 = vadd.s32 %v218, 4294967288
    %v221 = vperm.slane %v210, %v220
    %vm222 = vcmask 130112
    %v223 = vsel %vm222, %v221, %v219
    %v224 = vadd.s32 %v218, 4294967280
    %v225 = vperm.slane %v211, %v224
    %vm226 = vcmask 195712
    %v227 = vsel %vm226, %v225, %v223
    %v228 = vadd.s32 %v218, 4294967272
    %v229 = vperm.slane %v212, %v228
    %vm230 = vcmask 261312
    %v231 = vsel %vm230, %v229, %v227
    %vm233 = vcmask 253952
    %234 = vst.msk [vmem:[#allocation3] sm:$0x1] %vm233, %v231
    // Predicated region
    $region34: #{tpu_custom_call.1} parent=1 // pred_check
      _
    $region35: #{tpu_custom_call.1} parent=1 // pred_check_branch
      %236 = sbr.rel (0) target = $region37
    $region36: #{tpu_custom_call.1} parent=1 // pred_region
      %238 = vsyncadd [#allocation4], 0
      %s240 = sshll.u32 [#allocation3], 4
      %s241 = int_to_ptr.vmem [resolvable:$true] %s240
      %s242 = sshll.u32 %s8, 4
      %s243 = int_to_ptr.hbm [resolvable:$true] %s242
      %245 = dma.vmem_to_hbm [thread:$0]  %s241, 16, %s243, [#allocation4]
    $region37: #{tpu_custom_call.1} parent=1 // pred_fallthru
      _
    // Predicated region
    $region38: #{tpu_custom_call.1} parent=1 // pred_check
      _
    $region39: #{tpu_custom_call.1} parent=1 // pred_check_branch
      %247 = sbr.rel (0) target = $region41
    $region40: #{tpu_custom_call.1} parent=1 // pred_region
      %249 = dma.done [#allocation4], 16
    $region41: #{tpu_custom_call.1} parent=1 // pred_fallthru
      _
    %250 = vsyncpa [#allocation4], 1

</llo_original>
